<compile_context>
chip_gen: v7x
topology: tpu7x:2x2x1
jax: 0.10.0
libtpu: 0.0.40
codegen_flags: <defaults>
</compile_context>

<pallas_src>
import jax
import jax.numpy as jnp
from jax import lax
from jax.experimental import pallas as pl
from jax.experimental.pallas import tpu as pltpu

# Bias padding for fake (padded) classes.  Must stay float32 end-to-end: in
# bf16 it would become -inf and could produce NaNs after exp/normalize.
_NEG_BIG = -1e30


def _round_up(v, m):
    return ((v + m - 1) // m) * m


def _vmem_capacity_bytes():
    try:
        return int(pltpu.get_tpu_info().vmem_capacity_bytes)
    except Exception:
        return 64 << 20  # conservative (v7x-sized) default


def _resident_spec(block_shape, single_buffer):
    """BlockSpec for an operand with a constant index map (VMEM-resident)."""
    idx = lambda i, h: (0, 0)
    if single_buffer:
        # Constant index map -> double buffering buys nothing; single-buffer it.
        return pl.BlockSpec(block_shape, idx, pipeline_mode=pl.Buffered(1))
    return pl.BlockSpec(block_shape, idx)


def _select_tiles(B, C1, HW, itemsize, budget, b_tile_cap):
    """Pick (b_tile, hw_tile) so one x block stays within `budget` bytes."""
    # Batch tile: full B when small (a full-dim block dodges the multiple-of-8
    # rule); otherwise a multiple of 8.  Never pad the batch.
    if B <= b_tile_cap:
        b_tile = B
    else:
        b_tile = max(8, (b_tile_cap // 8) * 8)
    # Give the v7x dual-TensorCore "parallel" axis >= 2 blocks when the batch
    # splits cleanly (costs one extra ~0.35us grid step on v5e/v6e).
    if b_tile == B and B >= 16:
        b_tile = _round_up((B + 1) // 2, 8)

    def blk(bt, ht):
        return bt * C1 * ht * itemsize

    hw_tile = HW                       # prefer the whole spatial extent
    while blk(b_tile, hw_tile) > budget:
        if hw_tile == HW and HW > 128:
            hw_tile = min(
                max(128, (budget // (b_tile * C1 * itemsize)) // 128 * 128),
                _round_up(HW, 128))
        elif hw_tile > 128:
            hw_tile = max(128, (hw_tile // 2) // 128 * 128)
        elif b_tile > 8:
            b_tile = max(8, (b_tile // 2) // 8 * 8)
        else:
            break                      # minimal sane tiles; still correct
    return b_tile, hw_tile


def classification_head(x, weight, bias, *, b_tile_cap=128):
    """YOLOv8 ClassificationHead forward (eval path).

    x:      (B, C1, H, W) array (or list of such arrays -> concatenated on C).
    weight: (C2, C1)  PyTorch nn.Linear layout.  Kept in its own dtype; pass
            bf16 weights for large heads to halve the resident VMEM footprint.
    bias:   (C2,)
    returns (B, C2) float32 softmax probabilities.
    """
    if isinstance(x, (list, tuple)):
        x = jnp.concatenate(x, axis=1)

    B, C1, H, W = x.shape
    C2 = weight.shape[0]
    HW = H * W

    # Free relayout: (B, C1, H, W) -> (B, C1, HW).  No transpose, no activation
    # padding — the kernel reads x exactly once at its natural layout.
    x3 = x.reshape(B, C1, HW)

    # Tiny operand prep: only classes are padded (lane-dense output slab).
    C2p = _round_up(C2, 128)
    w_p = jnp.pad(weight.T, ((0, 0), (0, C2p - C2)))              # (C1, C2p)
    b_p = jnp.pad(bias.reshape(1, C2).astype(jnp.float32),
                  ((0, 0), (0, C2p - C2)),
                  constant_values=_NEG_BIG)                        # (1, C2p) f32

    # Per-generation tiling / VMEM budget.
    cap = _vmem_capacity_bytes()
    if cap <= (64 << 20):        # v7x-class: 64 MiB physical VMEM per core
        x_budget, limit_cap = 8 << 20, 56 << 20
    else:                        # v5e / v6e: 128 MiB physical VMEM
        x_budget, limit_cap = 28 << 20, 100 << 20

    x_itemsize = jnp.dtype(x.dtype).itemsize
    b_tile, hw_tile = _select_tiles(B, C1, HW, x_itemsize, x_budget, b_tile_cap)
    need_hw_mask = (hw_tile < HW) and (HW % hw_tile != 0)

    grid = (pl.cdiv(B, b_tile), pl.cdiv(HW, hw_tile))
    inv_hw = 1.0 / float(HW)     # mean over the real spatial count

    def kernel(x_ref, w_ref, b_ref, o_ref, acc_ref):
        hw = pl.program_id(1)

        @pl.when(hw == 0)
        def _init():
            acc_ref[...] = jnp.zeros_like(acc_ref)

        xblk = x_ref[...]                                    # (b_tile, C1, hw_tile)
        if need_hw_mask:                                     # partial last HW block
            lane = lax.broadcasted_iota(jnp.int32, xblk.shape, 2)
            xblk = jnp.where(lane + hw * hw_tile < HW, xblk, 0)
        # Partial spatial sum over the lane (HW) axis, accumulated in f32
        # without materializing a full-tile f32 cast.
        acc_ref[...] += jnp.sum(xblk, axis=2, dtype=jnp.float32)

        @pl.when(hw == pl.num_programs(1) - 1)
        def _finalize():
            pooled = acc_ref[...] * inv_hw                   # (b_tile, C1) f32
            # Dropout(p=0.0) is identity -> no-op.
            logits = jnp.dot(pooled.astype(w_ref.dtype), w_ref[...],
                             preferred_element_type=jnp.float32)
            logits = logits + b_ref[...]                     # (b_tile, C2p) f32
            m = jnp.max(logits, axis=-1, keepdims=True)
            e = jnp.exp(logits - m)
            denom = jnp.sum(e, axis=-1, keepdims=True)
            o_ref[...] = (e / denom).astype(o_ref.dtype)     # exact divide

    # VMEM limit: double-buffered x / out streams, resident weight + bias
    # (counted twice in case single-buffering is unavailable), accumulator,
    # plus compiler-scratch headroom.
    w_itemsize = jnp.dtype(w_p.dtype).itemsize
    x_blk = b_tile * C1 * hw_tile * x_itemsize
    o_blk = b_tile * C2p * 4
    wb_blk = C1 * C2p * w_itemsize + C2p * 4
    acc_blk = b_tile * C1 * 4
    vmem_bytes = 2 * (x_blk + o_blk) + 2 * wb_blk + acc_blk + (4 << 20)
    vmem_bytes = int(min(max(vmem_bytes, 32 << 20), limit_cap))

    def _build(single_buffer):
        return pl.pallas_call(
            kernel,
            out_shape=jax.ShapeDtypeStruct((B, C2p), jnp.float32),
            grid_spec=pltpu.PrefetchScalarGridSpec(
                num_scalar_prefetch=0,
                grid=grid,
                in_specs=[
                    pl.BlockSpec((b_tile, C1, hw_tile), lambda i, h: (i, 0, h)),
                    _resident_spec((C1, C2p), single_buffer),   # W^T, resident
                    _resident_spec((1, C2p), single_buffer),    # bias, resident
                ],
                out_specs=pl.BlockSpec((b_tile, C2p), lambda i, h: (i, 0)),
                scratch_shapes=[pltpu.VMEM((b_tile, C1), jnp.float32)],
            ),
            compiler_params=pltpu.CompilerParams(
                dimension_semantics=("parallel", "arbitrary"),
                vmem_limit_bytes=vmem_bytes,
            ),
        )

    try:
        out_p = jax.block_until_ready(_build(True)(x3, w_p, b_p))
    except Exception:
        # pl.Buffered(1) / pipeline_mode unsupported on this JAX build -> retry
        # with default (double-buffered) resident operands.
        out_p = _build(False)(x3, w_p, b_p)

    return out_p[:, :C2]


def _reference(x, weight, bias):
    pooled = jnp.mean(x, axis=(2, 3))
    logits = pooled @ weight.T + bias
    return jax.nn.softmax(logits, axis=1)


if __name__ == "__main__":
    key = jax.random.PRNGKey(0)
    kx, kw, kb = jax.random.split(key, 3)

    B, C1, H, W = 2, 4, 16, 16
    C2 = 8

    x = jax.random.normal(kx, (B, C1, H, W), dtype=jnp.float32)
    # PyTorch Linear layout: weight (C2, C1), bias (C2,).
    weight = jax.random.normal(kw, (C2, C1), dtype=jnp.float32) * 0.1
    bias = jax.random.normal(kb, (C2,), dtype=jnp.float32) * 0.1

    out = classification_head(x, weight, bias)
    out = jax.block_until_ready(out)

    ref = _reference(x, weight, bias)
    assert out.shape == (B, C2)
    # Exact softmax divide -> tight tolerance (residual diff is matmul precision).
    assert jnp.allclose(out, ref, atol=5e-4, rtol=5e-4), "mismatch vs reference"

    print("KERNEL_OK")
</pallas_src>

<mosaic_0001>
module attributes {stable_mosaic.version = 11 : i64} {
  func.func @kernel(%arg0: i32, %arg1: i32, %arg2: memref<2x4x256xf32, #tpu.memory_space<vmem>>, %arg3: memref<4x128xf32, #tpu.memory_space<vmem>>, %arg4: memref<1x128xf32, #tpu.memory_space<vmem>>, %arg5: memref<2x128xf32, #tpu.memory_space<vmem>>, %arg6: memref<2x4xf32, #tpu.memory_space<vmem>>) attributes {dimension_semantics = [#tpu.dimension_semantics<parallel>, #tpu.dimension_semantics<arbitrary>], iteration_bounds = array<i64: 1, 1>, scalar_prefetch = 0 : i64, scratch_operands = 1 : i64, tpu.core_type = #tpu.core_type<tc>, window_params = [{transform_indices = @transform_0, window_bounds = array<i64: 2, 4, 256>}, {pipeline_mode = #tpu.pipeline_mode<synchronous>, transform_indices = @transform_1, window_bounds = array<i64: 4, 128>}, {pipeline_mode = #tpu.pipeline_mode<synchronous>, transform_indices = @transform_2, window_bounds = array<i64: 1, 128>}, {transform_indices = @transform_3, window_bounds = array<i64: 2, 128>}]} {
    %c0_i32 = arith.constant 0 : i32
    %0 = arith.cmpi eq, %arg1, %c0_i32 : i32
    %1 = arith.extui %0 : i1 to i32
    %c0_i32_0 = arith.constant 0 : i32
    %2 = arith.cmpi ne, %1, %c0_i32_0 : i32
    scf.if %2 {
      %cst_9 = arith.constant 0.000000e+00 : f32
      %11 = vector.broadcast %cst_9 : f32 to vector<2x4xf32>
      %c0_10 = arith.constant 0 : index
      %c0_11 = arith.constant 0 : index
      %12 = vector.load %arg6[%c0_10, %c0_11] : memref<2x4xf32, #tpu.memory_space<vmem>>, vector<2x4xf32>
      tpu.vector_store %arg6[%c0_10, %c0_11], %11 {strides = array<i32>} : memref<2x4xf32, #tpu.memory_space<vmem>>, vector<2x4xf32>,
    } else {
    }
    %c0 = arith.constant 0 : index
    %c0_1 = arith.constant 0 : index
    %c0_2 = arith.constant 0 : index
    %3 = vector.load %arg2[%c0, %c0_1, %c0_2] : memref<2x4x256xf32, #tpu.memory_space<vmem>>, vector<2x4x256xf32>
    %c0_3 = arith.constant 0 : index
    %c0_4 = arith.constant 0 : index
    %4 = vector.load %arg6[%c0_3, %c0_4] : memref<2x4xf32, #tpu.memory_space<vmem>>, vector<2x4xf32>
    %cst = arith.constant dense<0.000000e+00> : vector<2x4xf32>
    %5 = vector.multi_reduction <add>, %3, %cst [2] : vector<2x4x256xf32> to vector<2x4xf32>
    %6 = arith.addf %4, %5 : vector<2x4xf32>
    %c0_5 = arith.constant 0 : index
    %c0_6 = arith.constant 0 : index
    %7 = vector.load %arg6[%c0_5, %c0_6] : memref<2x4xf32, #tpu.memory_space<vmem>>, vector<2x4xf32>
    tpu.vector_store %arg6[%c0_5, %c0_6], %6 {strides = array<i32>} : memref<2x4xf32, #tpu.memory_space<vmem>>, vector<2x4xf32>,
    %c0_i32_7 = arith.constant 0 : i32
    %8 = arith.cmpi eq, %arg1, %c0_i32_7 : i32
    %9 = arith.extui %8 : i1 to i32
    %c0_i32_8 = arith.constant 0 : i32
    %10 = arith.cmpi ne, %9, %c0_i32_8 : i32
    scf.if %10 {
      %c0_9 = arith.constant 0 : index
      %c0_10 = arith.constant 0 : index
      %11 = vector.load %arg6[%c0_9, %c0_10] : memref<2x4xf32, #tpu.memory_space<vmem>>, vector<2x4xf32>
      %cst_11 = arith.constant 3.906250e-03 : f32
      %12 = vector.broadcast %cst_11 : f32 to vector<2x4xf32>
      %13 = arith.mulf %11, %12 : vector<2x4xf32>
      %c0_12 = arith.constant 0 : index
      %c0_13 = arith.constant 0 : index
      %14 = vector.load %arg3[%c0_12, %c0_13] : memref<4x128xf32, #tpu.memory_space<vmem>>, vector<4x128xf32>
      %cst_14 = arith.constant dense<0.000000e+00> : vector<2x128xf32>
      %15 = tpu.matmul %13, %14, %cst_14 {dimension_numbers = #tpu.dot_dimension_numbers<[1], [0], [0], [1], [0, 0, 1, 1], [], []>} : vector<2x4xf32>, vector<4x128xf32>, vector<2x128xf32> -> vector<2x128xf32>
      %c0_15 = arith.constant 0 : index
      %c0_16 = arith.constant 0 : index
      %16 = vector.load %arg4[%c0_15, %c0_16] : memref<1x128xf32, #tpu.memory_space<vmem>>, vector<1x128xf32>
      %17 = vector.broadcast %16 : vector<1x128xf32> to vector<2x128xf32>
      %18 = arith.addf %15, %17 : vector<2x128xf32>
      %cst_17 = arith.constant dense<0xFF800000> : vector<2xf32>
      %19 = vector.multi_reduction <maximumf>, %18, %cst_17 [1] : vector<2x128xf32> to vector<2xf32>
      %20 = vector.shape_cast %19 : vector<2xf32> to vector<2x1xf32>
      %21 = vector.broadcast %20 : vector<2x1xf32> to vector<2x128xf32>
      %22 = arith.subf %18, %21 : vector<2x128xf32>
      %23 = math.exp %22 : vector<2x128xf32>
      %cst_18 = arith.constant dense<0.000000e+00> : vector<2xf32>
      %24 = vector.multi_reduction <add>, %23, %cst_18 [1] : vector<2x128xf32> to vector<2xf32>
      %25 = vector.shape_cast %24 : vector<2xf32> to vector<2x1xf32>
      %26 = vector.broadcast %25 : vector<2x1xf32> to vector<2x128xf32>
      %27 = arith.divf %23, %26 : vector<2x128xf32>
      %c0_19 = arith.constant 0 : index
      %c0_20 = arith.constant 0 : index
      %28 = vector.load %arg5[%c0_19, %c0_20] : memref<2x128xf32, #tpu.memory_space<vmem>>, vector<2x128xf32>
      tpu.vector_store %arg5[%c0_19, %c0_20], %27 {strides = array<i32>} : memref<2x128xf32, #tpu.memory_space<vmem>>, vector<2x128xf32>,
    } else {
    }
    return
  }
  func.func @transform_0(%arg0: i32, %arg1: i32) -> (i32, i32, i32) {
    %c0_i32 = arith.constant 0 : i32
    %c0_i32_0 = arith.constant 0 : i32
    return %arg0, %c0_i32, %arg1 : i32, i32, i32
  }
  func.func @transform_1(%arg0: i32, %arg1: i32) -> (i32, i32) {
    %c0_i32 = arith.constant 0 : i32
    %c0_i32_0 = arith.constant 0 : i32
    %c0_i32_1 = arith.constant 0 : i32
    return %c0_i32, %c0_i32_0 : i32, i32
  }
  func.func @transform_2(%arg0: i32, %arg1: i32) -> (i32, i32) {
    %c0_i32 = arith.constant 0 : i32
    %c0_i32_0 = arith.constant 0 : i32
    %c0_i32_1 = arith.constant 0 : i32
    return %c0_i32, %c0_i32_0 : i32, i32
  }
  func.func @transform_3(%arg0: i32, %arg1: i32) -> (i32, i32) {
    %c0_i32 = arith.constant 0 : i32
    %c0_i32_0 = arith.constant 0 : i32
    return %arg0, %c0_i32 : i32, i32
  }
}

module attributes {stable_mosaic.version = 11 : i64} {
  func.func @kernel(%arg0: i32, %arg1: i32, %arg2: memref<2x4x256xf32, #tpu.memory_space<vmem>>, %arg3: memref<4x128xf32, #tpu.memory_space<vmem>>, %arg4: memref<1x128xf32, #tpu.memory_space<vmem>>, %arg5: memref<2x128xf32, #tpu.memory_space<vmem>>, %arg6: memref<2x4xf32, #tpu.memory_space<vmem>>) attributes {dimension_semantics = [#tpu.dimension_semantics<parallel>, #tpu.dimension_semantics<arbitrary>], iteration_bounds = array<i64: 1, 1>, scalar_prefetch = 0 : i64, scratch_operands = 1 : i64, tpu.core_type = #tpu.core_type<tc>, window_params = [{transform_indices = @transform_0, window_bounds = array<i64: 2, 4, 256>}, {pipeline_mode = #tpu.pipeline_mode<synchronous>, transform_indices = @transform_1, window_bounds = array<i64: 4, 128>}, {pipeline_mode = #tpu.pipeline_mode<synchronous>, transform_indices = @transform_2, window_bounds = array<i64: 1, 128>}, {transform_indices = @transform_3, window_bounds = array<i64: 2, 128>}]} {
    %c0_i32 = arith.constant 0 : i32
    %0 = arith.cmpi eq, %arg1, %c0_i32 : i32
    %1 = arith.extui %0 : i1 to i32
    %c0_i32_0 = arith.constant 0 : i32
    %2 = arith.cmpi ne, %1, %c0_i32_0 : i32
    scf.if %2 {
      %cst_9 = arith.constant 0.000000e+00 : f32
      %11 = vector.broadcast %cst_9 : f32 to vector<2x4xf32>
      %c0_10 = arith.constant 0 : index
      %c0_11 = arith.constant 0 : index
      %12 = vector.load %arg6[%c0_10, %c0_11] : memref<2x4xf32, #tpu.memory_space<vmem>>, vector<2x4xf32>
      tpu.vector_store %arg6[%c0_10, %c0_11], %11 {strides = array<i32>} : memref<2x4xf32, #tpu.memory_space<vmem>>, vector<2x4xf32>,
    } else {
    }
    %c0 = arith.constant 0 : index
    %c0_1 = arith.constant 0 : index
    %c0_2 = arith.constant 0 : index
    %3 = vector.load %arg2[%c0, %c0_1, %c0_2] : memref<2x4x256xf32, #tpu.memory_space<vmem>>, vector<2x4x256xf32>
    %c0_3 = arith.constant 0 : index
    %c0_4 = arith.constant 0 : index
    %4 = vector.load %arg6[%c0_3, %c0_4] : memref<2x4xf32, #tpu.memory_space<vmem>>, vector<2x4xf32>
    %cst = arith.constant dense<0.000000e+00> : vector<2x4xf32>
    %5 = vector.multi_reduction <add>, %3, %cst [2] : vector<2x4x256xf32> to vector<2x4xf32>
    %6 = arith.addf %4, %5 : vector<2x4xf32>
    %c0_5 = arith.constant 0 : index
    %c0_6 = arith.constant 0 : index
    %7 = vector.load %arg6[%c0_5, %c0_6] : memref<2x4xf32, #tpu.memory_space<vmem>>, vector<2x4xf32>
    tpu.vector_store %arg6[%c0_5, %c0_6], %6 {strides = array<i32>} : memref<2x4xf32, #tpu.memory_space<vmem>>, vector<2x4xf32>,
    %c0_i32_7 = arith.constant 0 : i32
    %8 = arith.cmpi eq, %arg1, %c0_i32_7 : i32
    %9 = arith.extui %8 : i1 to i32
    %c0_i32_8 = arith.constant 0 : i32
    %10 = arith.cmpi ne, %9, %c0_i32_8 : i32
    scf.if %10 {
      %c0_9 = arith.constant 0 : index
      %c0_10 = arith.constant 0 : index
      %11 = vector.load %arg6[%c0_9, %c0_10] : memref<2x4xf32, #tpu.memory_space<vmem>>, vector<2x4xf32>
      %cst_11 = arith.constant 3.906250e-03 : f32
      %12 = vector.broadcast %cst_11 : f32 to vector<2x4xf32>
      %13 = arith.mulf %11, %12 : vector<2x4xf32>
      %c0_12 = arith.constant 0 : index
      %c0_13 = arith.constant 0 : index
      %14 = vector.load %arg3[%c0_12, %c0_13] : memref<4x128xf32, #tpu.memory_space<vmem>>, vector<4x128xf32>
      %cst_14 = arith.constant dense<0.000000e+00> : vector<2x128xf32>
      %15 = tpu.matmul %13, %14, %cst_14 {dimension_numbers = #tpu.dot_dimension_numbers<[1], [0], [0], [1], [0, 0, 1, 1], [], []>} : vector<2x4xf32>, vector<4x128xf32>, vector<2x128xf32> -> vector<2x128xf32>
      %c0_15 = arith.constant 0 : index
      %c0_16 = arith.constant 0 : index
      %16 = vector.load %arg4[%c0_15, %c0_16] : memref<1x128xf32, #tpu.memory_space<vmem>>, vector<1x128xf32>
      %17 = vector.broadcast %16 : vector<1x128xf32> to vector<2x128xf32>
      %18 = arith.addf %15, %17 : vector<2x128xf32>
      %cst_17 = arith.constant dense<0xFF800000> : vector<2xf32>
      %19 = vector.multi_reduction <maximumf>, %18, %cst_17 [1] : vector<2x128xf32> to vector<2xf32>
      %20 = vector.shape_cast %19 : vector<2xf32> to vector<2x1xf32>
      %21 = vector.broadcast %20 : vector<2x1xf32> to vector<2x128xf32>
      %22 = arith.subf %18, %21 : vector<2x128xf32>
      %23 = math.exp %22 : vector<2x128xf32>
      %cst_18 = arith.constant dense<0.000000e+00> : vector<2xf32>
      %24 = vector.multi_reduction <add>, %23, %cst_18 [1] : vector<2x128xf32> to vector<2xf32>
      %25 = vector.shape_cast %24 : vector<2xf32> to vector<2x1xf32>
      %26 = vector.broadcast %25 : vector<2x1xf32> to vector<2x128xf32>
      %27 = arith.divf %23, %26 : vector<2x128xf32>
      %c0_19 = arith.constant 0 : index
      %c0_20 = arith.constant 0 : index
      %28 = vector.load %arg5[%c0_19, %c0_20] : memref<2x128xf32, #tpu.memory_space<vmem>>, vector<2x128xf32>
      tpu.vector_store %arg5[%c0_19, %c0_20], %27 {strides = array<i32>} : memref<2x128xf32, #tpu.memory_space<vmem>>, vector<2x128xf32>,
    } else {
    }
    return
  }
  func.func @transform_0(%arg0: i32, %arg1: i32) -> (i32, i32, i32) {
    %c0_i32 = arith.constant 0 : i32
    %c0_i32_0 = arith.constant 0 : i32
    return %arg0, %c0_i32, %arg1 : i32, i32, i32
  }
  func.func @transform_1(%arg0: i32, %arg1: i32) -> (i32, i32) {
    %c0_i32 = arith.constant 0 : i32
    %c0_i32_0 = arith.constant 0 : i32
    %c0_i32_1 = arith.constant 0 : i32
    return %c0_i32, %c0_i32_0 : i32, i32
  }
  func.func @transform_2(%arg0: i32, %arg1: i32) -> (i32, i32) {
    %c0_i32 = arith.constant 0 : i32
    %c0_i32_0 = arith.constant 0 : i32
    %c0_i32_1 = arith.constant 0 : i32
    return %c0_i32, %c0_i32_0 : i32, i32
  }
  func.func @transform_3(%arg0: i32, %arg1: i32) -> (i32, i32) {
    %c0_i32 = arith.constant 0 : i32
    %c0_i32_0 = arith.constant 0 : i32
    return %arg0, %c0_i32 : i32, i32
  }
}

</mosaic_0001>

<llo_original>
// kernel: tpu_custom_call.1
$region0: #{tpu_custom_call.1}
  #allocation0 [shape = 'u32[]', space=smem, size = 0x4, offset = 0x4, fixed_abs, tag = 'smem constant byte address 0x4 - core index']
  #allocation1 [shape = 'u32[144,128]{1,0:T(1,128)}', space=vmem, size = 0x12000, scoped, tag = 'internal scratch']
  #allocation2 [shape = 'f32[2,4]{1,0:T(2,128)}', space=vmem, size = 0x400, scoped, tag = 'scratch operand']
  %s0 = inlined_call_operand.hbm [shape: f32[2,4,256], index: 0, kind: input, shape index: {}]
  %s1 = inlined_call_operand.hbm [shape: f32[4,128], index: 1, kind: input, shape index: {}]
  %s2 = inlined_call_operand.vmem [shape: f32[1,128], index: 2, kind: input, shape index: {}]
  %s3 = inlined_call_operand.hbm [shape: f32[2,128], index: 3, kind: output, shape index: {}]
  %s4 = sld [smem:[#allocation0]]
  $region38: #{tpu_custom_call.1} parent=0
    _
  %s6 = ssub.s32 1, %s4
  %s7 = scalar_select 0, %s6, %s4
  $region1: #{tpu_custom_call.1} parent=0
    #allocation3 [shape = 'u8[8192]{0}', space=vmem, size = 0x2000, scoped, tag = 'input window, operand 0, single buffered']
    #allocation4 [shape = 's32[1]{0}', space=sflag, size = 0x4, scoped, tag = 'scoped memory for tpu_custom_call.1']
    #allocation5 [shape = 's32[1]{0}', space=sflag, size = 0x4, scoped, tag = 'scoped memory for tpu_custom_call.1']
    #allocation6 [shape = 'u8[2048]{0}', space=vmem, size = 0x800, scoped, tag = 'input window, operand 1, single buffered']
    #allocation7 [shape = 's32[1]{0}', space=sflag, size = 0x4, scoped, tag = 'scoped memory for tpu_custom_call.1']
    #allocation8 [shape = 'u8[1024]{0}', space=vmem, size = 0x400, scoped, tag = 'output window, operand 0, single buffered']
    %8 = vsyncpa [#allocation4], 0
    %9 = vsyncpa [#allocation7], 0
    %10 = vsyncpa [#allocation5], 0
    // Predicated region
    $region2: #{tpu_custom_call.1} parent=1 // pred_check
      _
    $region3: #{tpu_custom_call.1} parent=1 // pred_check_branch
      %12 = sbr.rel (0) target = $region5
    $region4: #{tpu_custom_call.1} parent=1 // pred_region
      %s14 = ssub.s32 256, 256
      %15 = vsyncadd [#allocation4], %s14
      %s16 = sshll.u32 [#allocation3], 4
      %s17 = int_to_ptr.vmem [resolvable:$true] %s16
      %22 = dma.hbm_to_vmem [thread:$0]  %s0, 256, %s17, [#allocation4], 128, 128, 8
    $region5: #{tpu_custom_call.1} parent=1 // pred_fallthru
      _
    // Predicated region
    $region6: #{tpu_custom_call.1} parent=1 // pred_check
      _
    $region7: #{tpu_custom_call.1} parent=1 // pred_check_branch
      %24 = sbr.rel (0) target = $region9
    $region8: #{tpu_custom_call.1} parent=1 // pred_region
      %s26 = ssub.s32 64, 64
      %27 = vsyncadd [#allocation7], %s26
      %s29 = sshll.u32 [#allocation6], 4
      %s30 = int_to_ptr.vmem [resolvable:$true] %s29
      %32 = dma.hbm_to_vmem [thread:$0]  %s1, 64, %s30, [#allocation7]
    $region9: #{tpu_custom_call.1} parent=1 // pred_fallthru
      _
    // Predicated region
    $region10: #{tpu_custom_call.1} parent=1 // pred_check
      _
    $region11: #{tpu_custom_call.1} parent=1 // pred_check_branch
      %34 = sbr.rel (0) target = $region13
    $region12: #{tpu_custom_call.1} parent=1 // pred_region
      _
    $region13: #{tpu_custom_call.1} parent=1 // pred_fallthru
      _
    // Predicated region
    $region14: #{tpu_custom_call.1} parent=1 // pred_check
      _
    $region15: #{tpu_custom_call.1} parent=1 // pred_check_branch
      %36 = sbr.rel (0) target = $region17
    $region16: #{tpu_custom_call.1} parent=1 // pred_region
      %37 = dma.done [#allocation4], 256
    $region17: #{tpu_custom_call.1} parent=1 // pred_fallthru
      _
    // Predicated region
    $region18: #{tpu_custom_call.1} parent=1 // pred_check
      _
    $region19: #{tpu_custom_call.1} parent=1 // pred_check_branch
      %39 = sbr.rel (0) target = $region21
    $region20: #{tpu_custom_call.1} parent=1 // pred_region
      %40 = dma.done [#allocation7], 64
    $region21: #{tpu_custom_call.1} parent=1 // pred_fallthru
      _
    %p41 = scmp.eq.s32.totalorder 0, 0
    // Predicated region
    $region22: #{tpu_custom_call.1} parent=1 // pred_check
      %p42 = pneg %p41
    $region23: #{tpu_custom_call.1} parent=1 // pred_check_branch
      %44 = sbr.rel (%p42) target = $region25
    $region24: #{tpu_custom_call.1} parent=1 // pred_region
      %vm45 = vcmask 25600
      %46 = vst.msk [vmem:[#allocation2] sm:$0x3] %vm45, 0.0
    $region25: #{tpu_custom_call.1} parent=1 // pred_fallthru
      _
    %v47 = vld [vmem:[#allocation3] sm:$0xff]
    %v48 = vld [vmem:[#allocation3 + $0x8] sm:$0xff]
    %v49 = vld [vmem:[#allocation2] sm:$0x3]
    %v52 = vcombine.high %v47, %v47
    %v53 = vcombine.high %v48, %v48
    %vm56 = vcmask 1043456
    %v57 = vsel %vm56, %v47, 0.0
    %v58 = vsel %vm56, %v52, 0.0
    %v59 = vadd.f32 %v57, %v58
    %60 = vadd.xlane.f32.xlu0 %v59
    %v61 = vpop.xlane.xlu0 %60
    %v62 = vsel %vm56, %v48, 0.0
    %v63 = vsel %vm56, %v53, 0.0
    %v64 = vadd.f32 %v62, %v63
    %65 = vadd.xlane.f32.xlu0 %v64
    %v66 = vpop.xlane.xlu0 %65
    %v69 = vlaneseq
    %v70 = vand.u32 %v69, 127
    %v71 = vlaneseq
    %v72 = vshrl.u32 %v71, 7
    %v73 = vsub.s32 %v70, %v72
    %v74 = vrot.slane %v61, %v73
    %v75 = vlaneseq
    %v76 = vshrl.u32 %v75, 7
    %v77 = vsub.s32 %v70, %v76
    %v78 = vrot.slane %v66, %v77
    %vm79 = vcmask 1041409
    %v80 = vsel %vm79, %v78, %v74
    %v82 = vadd.f32 %v49, %v80
    %vm83 = vcmask 25600
    %84 = vst.msk [vmem:[#allocation2] sm:$0x3] %vm83, %v82
    // Predicated region
    $region26: #{tpu_custom_call.1} parent=1 // pred_check
      %p85 = pneg %p41
    $region27: #{tpu_custom_call.1} parent=1 // pred_check_branch
      %87 = sbr.rel (%p85) target = $region29
    $region28: #{tpu_custom_call.1} parent=1 // pred_region
      %v88 = vld [vmem:[#allocation2] sm:$0x3]
      %v89 = vmul.f32 %v88, 0.00390625
      %v90 = vld [vmem:[#allocation6] sm:$0xf]
      %v91 = vld [vmem:[%s2] sm:$0x1]
      %v93 = vlaneseq
      %v94 = vshrl.u32 %v93, 7
      %v95 = vsub.s32 0, %v94
      %v96 = vrot.slane %v91, %v95
      %vm98 = vcmask 31744
      %v100 = vsel %vm98, %v89, 0
      %v103 = vsel %vm56, %v90, 0
      %105 = vmatprep.subr.mxu0 0.0
      %106 = vmatpush1.msra.mxu0 %v103
      %107 = vmatprep.subr.mxu0 0.0
      %108 = vmatpush1.msra.mxu0 0.0
      %109 = vmatprep.subr.mxu0 0.0
      %110 = vmatpush1.msra.mxu0 0.0
      %111 = vmatprep.subr.mxu0 0.0
      %112 = vmatpush1.msra.mxu0 0.0
      %113 = vmatprep.subr.mxu0 0.0
      %114 = vmatpush1.msra.mxu0 0.0
      %115 = vmatprep.subr.mxu0 0.0
      %116 = vmatpush1.msra.mxu0 0.0
      %117 = vmatprep.subr.mxu0 0.0
      %118 = vmatpush1.msra.mxu0 0.0
      %119 = vmatprep.subr.mxu0 0.0
      %120 = vmatpush1.msra.mxu0 0.0
      %121 = vmatprep.subr.mxu0 0.0
      %122 = vmatpush1.msra.mxu0 0.0
      %123 = vmatprep.subr.mxu0 0.0
      %124 = vmatpush1.msra.mxu0 0.0
      %125 = vmatprep.subr.mxu0 0.0
      %126 = vmatpush1.msra.mxu0 0.0
      %127 = vmatprep.subr.mxu0 0.0
      %128 = vmatpush1.msra.mxu0 0.0
      %129 = vmatprep.subr.mxu0 0.0
      %130 = vmatpush1.msra.mxu0 0.0
      %131 = vmatprep.subr.mxu0 0.0
      %132 = vmatpush1.msra.mxu0 0.0
      %133 = vmatprep.subr.mxu0 0.0
      %134 = vmatpush1.msra.mxu0 0.0
      %135 = vmatprep.subr.mxu0 0.0
      %136 = vmatpush1.msra.mxu0 0.0
      %137 = vmatprep.subr.mxu0 0.0
      %138 = vmatpush1.msra.mxu0 0.0
      %139 = vmatprep.subr.mxu0 0.0
      %140 = vmatpush1.msra.mxu0 0.0
      %141 = vmatprep.subr.mxu0 0.0
      %142 = vmatpush1.msra.mxu0 0.0
      %143 = vmatprep.subr.mxu0 0.0
      %144 = vmatpush1.msra.mxu0 0.0
      %145 = vmatprep.subr.mxu0 0.0
      %146 = vmatpush1.msra.mxu0 0.0
      %147 = vmatprep.subr.mxu0 0.0
      %148 = vmatpush1.msra.mxu0 0.0
      %149 = vmatprep.subr.mxu0 0.0
      %150 = vmatpush1.msra.mxu0 0.0
      %151 = vmatprep.subr.mxu0 0.0
      %152 = vmatpush1.msra.mxu0 0.0
      %153 = vmatprep.subr.mxu0 0.0
      %154 = vmatpush1.msra.mxu0 0.0
      %155 = vmatprep.subr.mxu0 0.0
      %156 = vmatpush1.msra.mxu0 0.0
      %157 = vmatprep.subr.mxu0 0.0
      %158 = vmatpush1.msra.mxu0 0.0
      %159 = vmatprep.subr.mxu0 0.0
      %160 = vmatpush1.msra.mxu0 0.0
      %161 = vmatprep.subr.mxu0 0.0
      %162 = vmatpush1.msra.mxu0 0.0
      %163 = vmatprep.subr.mxu0 0.0
      %164 = vmatpush1.msra.mxu0 0.0
      %165 = vmatprep.subr.mxu0 0.0
      %166 = vmatpush1.msra.mxu0 0.0
      %167 = vmatprep.subr.mxu0 0.0
      %168 = vmatpush1.msra.mxu0 0.0
      %169 = vmatprep.mubr.f32.mxu0 0.0
      %170 = vmatmul.mubr.f32.gmra.mrb[0].mxu0 %v100
      %v171 = vpop.f32.mrb[0].mxu0
      %v172 = vadd.f32 %v96, %v171
      %v173 = vpop.f32.mrb[0].mxu0
      %174 = vdwg.mxu0
      %vm175 = vcmask 1041408
      %v176 = vsel %vm175, %v172, -inf
      %177 = vmax.xlane.f32.xlu0 %v176
      %v178 = vpop.xlane.xlu0 %177
      %v179 = vsub.f32 %v172, %v178
      %v180 = vmul.f32 %v179, 1.442695
      %v181 = vpow.pop %v180
      %v182 = vsel %vm175, %v181, 0.0
      %183 = vadd.xlane.f32.xlu0 %v182
      %v184 = vpop.xlane.xlu0 %183
      %v185 = vrcp.pop %v184
      %v186 = vmul.f32 %v181, %v185
      %187 = vst [vmem:[#allocation8] sm:$0x3] %v186
    $region29: #{tpu_custom_call.1} parent=1 // pred_fallthru
      _
    // Predicated region
    $region30: #{tpu_custom_call.1} parent=1 // pred_check
      _
    $region31: #{tpu_custom_call.1} parent=1 // pred_check_branch
      %189 = sbr.rel (0) target = $region33
    $region32: #{tpu_custom_call.1} parent=1 // pred_region
      %s191 = ssub.s32 32, 32
      %192 = vsyncadd [#allocation5], %s191
      %s194 = sshll.u32 [#allocation8], 4
      %s195 = int_to_ptr.vmem [resolvable:$true] %s194
      %197 = dma.vmem_to_hbm [thread:$0]  %s195, 32, %s3, [#allocation5]
    $region33: #{tpu_custom_call.1} parent=1 // pred_fallthru
      _
    // Predicated region
    $region34: #{tpu_custom_call.1} parent=1 // pred_check
      _
    $region35: #{tpu_custom_call.1} parent=1 // pred_check_branch
      %199 = sbr.rel (0) target = $region37
    $region36: #{tpu_custom_call.1} parent=1 // pred_region
      %200 = dma.done [#allocation5], 32
    $region37: #{tpu_custom_call.1} parent=1 // pred_fallthru
      _
    %201 = vsyncpa [#allocation4], 1
    %202 = vsyncpa [#allocation7], 1
    %203 = vsyncpa [#allocation5], 1

// kernel: tpu_custom_call.1
$region0: #{tpu_custom_call.1}
  #allocation0 [shape = 'u32[]', space=smem, size = 0x4, offset = 0x4, fixed_abs, tag = 'smem constant byte address 0x4 - core index']
  #allocation1 [shape = 'u32[144,128]{1,0:T(1,128)}', space=vmem, size = 0x12000, scoped, tag = 'internal scratch']
  #allocation2 [shape = 'f32[2,4]{1,0:T(2,128)}', space=vmem, size = 0x400, scoped, tag = 'scratch operand']
  %s0 = inlined_call_operand.hbm [shape: f32[2,4,256], index: 0, kind: input, shape index: {}]
  %s1 = inlined_call_operand.hbm [shape: f32[4,128], index: 1, kind: input, shape index: {}]
  %s2 = inlined_call_operand.vmem [shape: f32[1,128], index: 2, kind: input, shape index: {}]
  %s3 = inlined_call_operand.hbm [shape: f32[2,128], index: 3, kind: output, shape index: {}]
  %s4 = sld [smem:[#allocation0]]
  $region38: #{tpu_custom_call.1} parent=0
    _
  %s6 = ssub.s32 1, %s4
  %s7 = scalar_select 0, %s6, %s4
  $region1: #{tpu_custom_call.1} parent=0
    #allocation3 [shape = 'u8[8192]{0}', space=vmem, size = 0x2000, scoped, tag = 'input window, operand 0, single buffered']
    #allocation4 [shape = 's32[1]{0}', space=sflag, size = 0x4, scoped, tag = 'scoped memory for tpu_custom_call.1']
    #allocation5 [shape = 's32[1]{0}', space=sflag, size = 0x4, scoped, tag = 'scoped memory for tpu_custom_call.1']
    #allocation6 [shape = 'u8[2048]{0}', space=vmem, size = 0x800, scoped, tag = 'input window, operand 1, single buffered']
    #allocation7 [shape = 's32[1]{0}', space=sflag, size = 0x4, scoped, tag = 'scoped memory for tpu_custom_call.1']
    #allocation8 [shape = 'u8[1024]{0}', space=vmem, size = 0x400, scoped, tag = 'output window, operand 0, single buffered']
    %8 = vsyncpa [#allocation4], 0
    %9 = vsyncpa [#allocation7], 0
    %10 = vsyncpa [#allocation5], 0
    // Predicated region
    $region2: #{tpu_custom_call.1} parent=1 // pred_check
      _
    $region3: #{tpu_custom_call.1} parent=1 // pred_check_branch
      %12 = sbr.rel (0) target = $region5
    $region4: #{tpu_custom_call.1} parent=1 // pred_region
      %s14 = ssub.s32 256, 256
      %15 = vsyncadd [#allocation4], %s14
      %s16 = sshll.u32 [#allocation3], 4
      %s17 = int_to_ptr.vmem [resolvable:$true] %s16
      %22 = dma.hbm_to_vmem [thread:$0]  %s0, 256, %s17, [#allocation4], 128, 128, 8
    $region5: #{tpu_custom_call.1} parent=1 // pred_fallthru
      _
    // Predicated region
    $region6: #{tpu_custom_call.1} parent=1 // pred_check
      _
    $region7: #{tpu_custom_call.1} parent=1 // pred_check_branch
      %24 = sbr.rel (0) target = $region9
    $region8: #{tpu_custom_call.1} parent=1 // pred_region
      %s26 = ssub.s32 64, 64
      %27 = vsyncadd [#allocation7], %s26
      %s29 = sshll.u32 [#allocation6], 4
      %s30 = int_to_ptr.vmem [resolvable:$true] %s29
      %32 = dma.hbm_to_vmem [thread:$0]  %s1, 64, %s30, [#allocation7]
    $region9: #{tpu_custom_call.1} parent=1 // pred_fallthru
      _
    // Predicated region
    $region10: #{tpu_custom_call.1} parent=1 // pred_check
      _
    $region11: #{tpu_custom_call.1} parent=1 // pred_check_branch
      %34 = sbr.rel (0) target = $region13
    $region12: #{tpu_custom_call.1} parent=1 // pred_region
      _
    $region13: #{tpu_custom_call.1} parent=1 // pred_fallthru
      _
    // Predicated region
    $region14: #{tpu_custom_call.1} parent=1 // pred_check
      _
    $region15: #{tpu_custom_call.1} parent=1 // pred_check_branch
      %36 = sbr.rel (0) target = $region17
    $region16: #{tpu_custom_call.1} parent=1 // pred_region
      %37 = dma.done [#allocation4], 256
    $region17: #{tpu_custom_call.1} parent=1 // pred_fallthru
      _
    // Predicated region
    $region18: #{tpu_custom_call.1} parent=1 // pred_check
      _
    $region19: #{tpu_custom_call.1} parent=1 // pred_check_branch
      %39 = sbr.rel (0) target = $region21
    $region20: #{tpu_custom_call.1} parent=1 // pred_region
      %40 = dma.done [#allocation7], 64
    $region21: #{tpu_custom_call.1} parent=1 // pred_fallthru
      _
    %p41 = scmp.eq.s32.totalorder 0, 0
    // Predicated region
    $region22: #{tpu_custom_call.1} parent=1 // pred_check
      %p42 = pneg %p41
    $region23: #{tpu_custom_call.1} parent=1 // pred_check_branch
      %44 = sbr.rel (%p42) target = $region25
    $region24: #{tpu_custom_call.1} parent=1 // pred_region
      %vm45 = vcmask 25600
      %46 = vst.msk [vmem:[#allocation2] sm:$0x3] %vm45, 0.0
    $region25: #{tpu_custom_call.1} parent=1 // pred_fallthru
      _
    %v47 = vld [vmem:[#allocation3] sm:$0xff]
    %v48 = vld [vmem:[#allocation3 + $0x8] sm:$0xff]
    %v49 = vld [vmem:[#allocation2] sm:$0x3]
    %v52 = vcombine.high %v47, %v47
    %v53 = vcombine.high %v48, %v48
    %vm56 = vcmask 1043456
    %v57 = vsel %vm56, %v47, 0.0
    %v58 = vsel %vm56, %v52, 0.0
    %v59 = vadd.f32 %v57, %v58
    %60 = vadd.xlane.f32.xlu0 %v59
    %v61 = vpop.xlane.xlu0 %60
    %v62 = vsel %vm56, %v48, 0.0
    %v63 = vsel %vm56, %v53, 0.0
    %v64 = vadd.f32 %v62, %v63
    %65 = vadd.xlane.f32.xlu0 %v64
    %v66 = vpop.xlane.xlu0 %65
    %v69 = vlaneseq
    %v70 = vand.u32 %v69, 127
    %v71 = vlaneseq
    %v72 = vshrl.u32 %v71, 7
    %v73 = vsub.s32 %v70, %v72
    %v74 = vrot.slane %v61, %v73
    %v75 = vlaneseq
    %v76 = vshrl.u32 %v75, 7
    %v77 = vsub.s32 %v70, %v76
    %v78 = vrot.slane %v66, %v77
    %vm79 = vcmask 1041409
    %v80 = vsel %vm79, %v78, %v74
    %v82 = vadd.f32 %v49, %v80
    %vm83 = vcmask 25600
    %84 = vst.msk [vmem:[#allocation2] sm:$0x3] %vm83, %v82
    // Predicated region
    $region26: #{tpu_custom_call.1} parent=1 // pred_check
      %p85 = pneg %p41
    $region27: #{tpu_custom_call.1} parent=1 // pred_check_branch
      %87 = sbr.rel (%p85) target = $region29
    $region28: #{tpu_custom_call.1} parent=1 // pred_region
      %v88 = vld [vmem:[#allocation2] sm:$0x3]
      %v89 = vmul.f32 %v88, 0.00390625
      %v90 = vld [vmem:[#allocation6] sm:$0xf]
      %v91 = vld [vmem:[%s2] sm:$0x1]
      %v93 = vlaneseq
      %v94 = vshrl.u32 %v93, 7
      %v95 = vsub.s32 0, %v94
      %v96 = vrot.slane %v91, %v95
      %vm98 = vcmask 31744
      %v100 = vsel %vm98, %v89, 0
      %v103 = vsel %vm56, %v90, 0
      %105 = vmatprep.subr.mxu0 0.0
      %106 = vmatpush1.msra.mxu0 %v103
      %107 = vmatprep.subr.mxu0 0.0
      %108 = vmatpush1.msra.mxu0 0.0
      %109 = vmatprep.subr.mxu0 0.0
      %110 = vmatpush1.msra.mxu0 0.0
      %111 = vmatprep.subr.mxu0 0.0
      %112 = vmatpush1.msra.mxu0 0.0
      %113 = vmatprep.subr.mxu0 0.0
      %114 = vmatpush1.msra.mxu0 0.0
      %115 = vmatprep.subr.mxu0 0.0
      %116 = vmatpush1.msra.mxu0 0.0
      %117 = vmatprep.subr.mxu0 0.0
      %118 = vmatpush1.msra.mxu0 0.0
      %119 = vmatprep.subr.mxu0 0.0
      %120 = vmatpush1.msra.mxu0 0.0
      %121 = vmatprep.subr.mxu0 0.0
      %122 = vmatpush1.msra.mxu0 0.0
      %123 = vmatprep.subr.mxu0 0.0
      %124 = vmatpush1.msra.mxu0 0.0
      %125 = vmatprep.subr.mxu0 0.0
      %126 = vmatpush1.msra.mxu0 0.0
      %127 = vmatprep.subr.mxu0 0.0
      %128 = vmatpush1.msra.mxu0 0.0
      %129 = vmatprep.subr.mxu0 0.0
      %130 = vmatpush1.msra.mxu0 0.0
      %131 = vmatprep.subr.mxu0 0.0
      %132 = vmatpush1.msra.mxu0 0.0
      %133 = vmatprep.subr.mxu0 0.0
      %134 = vmatpush1.msra.mxu0 0.0
      %135 = vmatprep.subr.mxu0 0.0
      %136 = vmatpush1.msra.mxu0 0.0
      %137 = vmatprep.subr.mxu0 0.0
      %138 = vmatpush1.msra.mxu0 0.0
      %139 = vmatprep.subr.mxu0 0.0
      %140 = vmatpush1.msra.mxu0 0.0
      %141 = vmatprep.subr.mxu0 0.0
      %142 = vmatpush1.msra.mxu0 0.0
      %143 = vmatprep.subr.mxu0 0.0
      %144 = vmatpush1.msra.mxu0 0.0
      %145 = vmatprep.subr.mxu0 0.0
      %146 = vmatpush1.msra.mxu0 0.0
      %147 = vmatprep.subr.mxu0 0.0
      %148 = vmatpush1.msra.mxu0 0.0
      %149 = vmatprep.subr.mxu0 0.0
      %150 = vmatpush1.msra.mxu0 0.0
      %151 = vmatprep.subr.mxu0 0.0
      %152 = vmatpush1.msra.mxu0 0.0
      %153 = vmatprep.subr.mxu0 0.0
      %154 = vmatpush1.msra.mxu0 0.0
      %155 = vmatprep.subr.mxu0 0.0
      %156 = vmatpush1.msra.mxu0 0.0
      %157 = vmatprep.subr.mxu0 0.0
      %158 = vmatpush1.msra.mxu0 0.0
      %159 = vmatprep.subr.mxu0 0.0
      %160 = vmatpush1.msra.mxu0 0.0
      %161 = vmatprep.subr.mxu0 0.0
      %162 = vmatpush1.msra.mxu0 0.0
      %163 = vmatprep.subr.mxu0 0.0
      %164 = vmatpush1.msra.mxu0 0.0
      %165 = vmatprep.subr.mxu0 0.0
      %166 = vmatpush1.msra.mxu0 0.0
      %167 = vmatprep.subr.mxu0 0.0
      %168 = vmatpush1.msra.mxu0 0.0
      %169 = vmatprep.mubr.f32.mxu0 0.0
      %170 = vmatmul.mubr.f32.gmra.mrb[0].mxu0 %v100
      %v171 = vpop.f32.mrb[0].mxu0
      %v172 = vadd.f32 %v96, %v171
      %v173 = vpop.f32.mrb[0].mxu0
      %174 = vdwg.mxu0
      %vm175 = vcmask 1041408
      %v176 = vsel %vm175, %v172, -inf
      %177 = vmax.xlane.f32.xlu0 %v176
      %v178 = vpop.xlane.xlu0 %177
      %v179 = vsub.f32 %v172, %v178
      %v180 = vmul.f32 %v179, 1.442695
      %v181 = vpow.pop %v180
      %v182 = vsel %vm175, %v181, 0.0
      %183 = vadd.xlane.f32.xlu0 %v182
      %v184 = vpop.xlane.xlu0 %183
      %v185 = vrcp.pop %v184
      %v186 = vmul.f32 %v181, %v185
      %187 = vst [vmem:[#allocation8] sm:$0x3] %v186
    $region29: #{tpu_custom_call.1} parent=1 // pred_fallthru
      _
    // Predicated region
    $region30: #{tpu_custom_call.1} parent=1 // pred_check
      _
    $region31: #{tpu_custom_call.1} parent=1 // pred_check_branch
      %189 = sbr.rel (0) target = $region33
    $region32: #{tpu_custom_call.1} parent=1 // pred_region
      %s191 = ssub.s32 32, 32
      %192 = vsyncadd [#allocation5], %s191
      %s194 = sshll.u32 [#allocation8], 4
      %s195 = int_to_ptr.vmem [resolvable:$true] %s194
      %197 = dma.vmem_to_hbm [thread:$0]  %s195, 32, %s3, [#allocation5]
    $region33: #{tpu_custom_call.1} parent=1 // pred_fallthru
      _
    // Predicated region
    $region34: #{tpu_custom_call.1} parent=1 // pred_check
      _
    $region35: #{tpu_custom_call.1} parent=1 // pred_check_branch
      %199 = sbr.rel (0) target = $region37
    $region36: #{tpu_custom_call.1} parent=1 // pred_region
      %200 = dma.done [#allocation5], 32
    $region37: #{tpu_custom_call.1} parent=1 // pred_fallthru
      _
    %201 = vsyncpa [#allocation4], 1
    %202 = vsyncpa [#allocation7], 1
    %203 = vsyncpa [#allocation5], 1

</llo_original>
